<compile_context>
chip_gen: v5e
topology: v5e:2x2
jax: 0.10.0
libtpu: 0.0.40
codegen_flags: <defaults>
</compile_context>

<pallas_src>
import functools

import jax
import jax.numpy as jnp
from jax.experimental import pallas as pl
from jax.experimental.pallas import tpu as pltpu


def _mean_max_pool_kernel(x_ref, o_ref, acc_ref, *, inv_w):
    # NOTE: the init/finalize pattern below relies on the H-chunk axis being
    # the LAST (innermost, fastest-varying) grid axis.  Keep it there.
    h_idx = pl.program_id(1)

    @pl.when(h_idx == 0)
    def _init():
        acc_ref[...] = jnp.full(acc_ref.shape, -jnp.inf, dtype=acc_ref.dtype)

    # Sum over W with f32 accumulation fused into the reduce (no materialized
    # f32 copy of the tile).  x_ref: (tb, th, W) -> row_sum: (tb, th).
    row_sum = jnp.sum(x_ref[...], axis=-1, dtype=jnp.float32)
    # Partial max over this H chunk; keepdims makes it land directly in the
    # (tb, 1) accumulator layout (no per-step relayout / transpose).
    acc_ref[...] = jnp.maximum(acc_ref[...],
                               jnp.max(row_sum, axis=-1, keepdims=True))

    @pl.when(h_idx == pl.num_programs(1) - 1)
    def _finalize():
        # mean = sum / W; scaling by the positive constant 1/W after the max
        # is equivalent (monotone) and costs B multiplies instead of B*H.
        o_ref[...] = (acc_ref[...] * inv_w).astype(o_ref.dtype)


def _vmem_capacity_bytes():
    try:
        return int(pltpu.get_tpu_info().vmem_capacity_bytes)
    except Exception:
        # Conservative fallback: v7x has only 64 MiB of VMEM per TensorCore.
        return 64 * 1024 * 1024


def _pick_tile(dim, cap, align):
    """Pick a Mosaic-legal tile for a second-minor block dim.

    Legal = divisor of `dim` that is a multiple of `align` OR the full extent.
    Returns the largest legal tile <= cap; if nothing legal fits under the
    cap, returns the SMALLEST legal tile (never silently the biggest one) --
    the wrapper then grows vmem_limit_bytes to match the forced tile.
    """
    legal = [d for d in range(1, dim + 1)
             if dim % d == 0 and (d % align == 0 or d == dim)]
    fitting = [d for d in legal if d <= cap]
    return max(fitting) if fitting else min(legal)


def mean_max_pool(x):
    """x: (N, C, H, W) NCHW -> (N, C), matching the PyTorch MeanMaxPool module."""
    n, c, h, w = x.shape
    b = n * c
    itemsize = jnp.dtype(x.dtype).itemsize
    sublane = max(8, 32 // itemsize)      # 8 for f32, 16 for bf16, 32 for int8

    # (N, C, H, W) -> (B, H, W): free on contiguous NCHW; removes the %128
    # channel constraint and feeds the parallel grid with many even points.
    xf = x.reshape(b, h, w)

    vmem_cap = _vmem_capacity_bytes()
    # ~2-4 MiB input tiles: already at HBM roofline, leaves headroom under
    # v7x's 64 MiB VMEM and keeps grid points available for parallelism.
    tile_budget = max(min(4 << 20, vmem_cap // 24), 512 << 10)

    bytes_per_row = w * itemsize          # one H row (full W) of one b index
    # H chunk: fill most of the tile budget with H rows (W always stays whole
    # inside the block), assuming the minimal sublane-sized B tile.
    th = _pick_tile(h, max(tile_budget // (sublane * bytes_per_row), 1), sublane)
    # B tile: widen up to the remaining budget, but keep >= 8 parallel grid
    # points whenever the shape allows it (v7x shards "parallel" over 2 TCs).
    tb_cap = min(max(tile_budget // (th * bytes_per_row), 1), max(b // 8, 1))
    tb = _pick_tile(b, tb_cap, sublane)

    grid_b, grid_h = b // tb, h // th
    tile_bytes = tb * th * w * itemsize

    # Triple-buffer the streamed input when the H axis is long enough for it
    # to matter (hides DMA issue jitter / epilogue, mainly helps v7x).
    n_buf = 3 if grid_h >= 3 else 2
    in_map = lambda i, k: (i, k, 0)
    if n_buf == 3:
        in_spec = pl.BlockSpec((tb, th, w), in_map, pipeline_mode=pl.Buffered(3))
    else:
        in_spec = pl.BlockSpec((tb, th, w), in_map)

    # VMEM limit: actual buffer need + headroom, hard-capped at 48 MiB so the
    # kernel stays safe on v7x (64 MiB/TC) even if capacity is misreported.
    need = n_buf * tile_bytes + (4 << 20)
    vmem_limit = int(min(max(need, 32 << 20), 48 << 20, (vmem_cap * 3) // 4))

    kernel = functools.partial(_mean_max_pool_kernel, inv_w=float(1.0 / w))

    cost = pl.CostEstimate(
        flops=b * h * (w + 1),
        transcendentals=0,
        bytes_accessed=b * h * w * itemsize + b * itemsize,
    )

    out = pl.pallas_call(
        kernel,
        out_shape=jax.ShapeDtypeStruct((b, 1), x.dtype),
        grid_spec=pltpu.PrefetchScalarGridSpec(
            num_scalar_prefetch=0,
            grid=(grid_b, grid_h),            # H chunks MUST stay innermost
            in_specs=[in_spec],
            out_specs=pl.BlockSpec((tb, 1), lambda i, k: (i, 0)),
            scratch_shapes=[pltpu.VMEM((tb, 1), jnp.float32)],
        ),
        compiler_params=pltpu.CompilerParams(
            dimension_semantics=("parallel", "arbitrary"),
            vmem_limit_bytes=vmem_limit,
        ),
        cost_estimate=cost,
    )(xf)

    return out.reshape(n, c)


if __name__ == "__main__":
    key = jax.random.PRNGKey(0)
    x = jax.random.normal(key, (2, 4, 16, 16), dtype=jnp.float32)

    out = jax.block_until_ready(mean_max_pool(x))

    # Reference in plain JAX (same math as the PyTorch module).
    ref = jnp.max(jnp.mean(x, axis=-1), axis=-1)
    assert out.shape == (2, 4)
    assert jnp.allclose(out, ref, atol=1e-5, rtol=1e-5)

    print("KERNEL_OK")
</pallas_src>

<mosaic_0001>
module attributes {stable_mosaic.version = 11 : i64} {
  func.func @_mean_max_pool_kernel(%arg0: i32, %arg1: i32, %arg2: memref<8x16x16xf32, #tpu.memory_space<vmem>>, %arg3: memref<8x1xf32, #tpu.memory_space<vmem>>, %arg4: memref<8x1xf32, #tpu.memory_space<vmem>>) attributes {dimension_semantics = [#tpu.dimension_semantics<parallel>, #tpu.dimension_semantics<arbitrary>], iteration_bounds = array<i64: 1, 1>, scalar_prefetch = 0 : i64, scratch_operands = 1 : i64, tpu.core_type = #tpu.core_type<tc>, window_params = [{transform_indices = @transform_0, window_bounds = array<i64: 8, 16, 16>}, {transform_indices = @transform_1, window_bounds = array<i64: 8, 1>}]} {
    %c0_i32 = arith.constant 0 : i32
    %0 = arith.cmpi eq, %arg1, %c0_i32 : i32
    %1 = arith.extui %0 : i1 to i32
    %c0_i32_0 = arith.constant 0 : i32
    %2 = arith.cmpi ne, %1, %c0_i32_0 : i32
    scf.if %2 {
      %cst_10 = arith.constant 0xFF800000 : f32
      %13 = vector.broadcast %cst_10 : f32 to vector<8x1xf32>
      %c0_11 = arith.constant 0 : index
      %c0_12 = arith.constant 0 : index
      %14 = vector.load %arg4[%c0_11, %c0_12] : memref<8x1xf32, #tpu.memory_space<vmem>>, vector<8x1xf32>
      tpu.vector_store %arg4[%c0_11, %c0_12], %13 {strides = array<i32>} : memref<8x1xf32, #tpu.memory_space<vmem>>, vector<8x1xf32>,
    } else {
    }
    %c0 = arith.constant 0 : index
    %c0_1 = arith.constant 0 : index
    %c0_2 = arith.constant 0 : index
    %3 = vector.load %arg2[%c0, %c0_1, %c0_2] : memref<8x16x16xf32, #tpu.memory_space<vmem>>, vector<8x16x16xf32>
    %cst = arith.constant dense<0.000000e+00> : vector<8x16xf32>
    %4 = vector.multi_reduction <add>, %3, %cst [2] : vector<8x16x16xf32> to vector<8x16xf32>
    %c0_3 = arith.constant 0 : index
    %c0_4 = arith.constant 0 : index
    %5 = vector.load %arg4[%c0_3, %c0_4] : memref<8x1xf32, #tpu.memory_space<vmem>>, vector<8x1xf32>
    %cst_5 = arith.constant dense<0xFF800000> : vector<8xf32>
    %6 = vector.multi_reduction <maximumf>, %4, %cst_5 [1] : vector<8x16xf32> to vector<8xf32>
    %7 = vector.shape_cast %6 : vector<8xf32> to vector<8x1xf32>
    %8 = arith.maximumf %5, %7 : vector<8x1xf32>
    %c0_6 = arith.constant 0 : index
    %c0_7 = arith.constant 0 : index
    %9 = vector.load %arg4[%c0_6, %c0_7] : memref<8x1xf32, #tpu.memory_space<vmem>>, vector<8x1xf32>
    tpu.vector_store %arg4[%c0_6, %c0_7], %8 {strides = array<i32>} : memref<8x1xf32, #tpu.memory_space<vmem>>, vector<8x1xf32>,
    %c0_i32_8 = arith.constant 0 : i32
    %10 = arith.cmpi eq, %arg1, %c0_i32_8 : i32
    %11 = arith.extui %10 : i1 to i32
    %c0_i32_9 = arith.constant 0 : i32
    %12 = arith.cmpi ne, %11, %c0_i32_9 : i32
    scf.if %12 {
      %c0_10 = arith.constant 0 : index
      %c0_11 = arith.constant 0 : index
      %13 = vector.load %arg4[%c0_10, %c0_11] : memref<8x1xf32, #tpu.memory_space<vmem>>, vector<8x1xf32>
      %cst_12 = arith.constant 6.250000e-02 : f32
      %14 = vector.broadcast %cst_12 : f32 to vector<8x1xf32>
      %15 = arith.mulf %13, %14 : vector<8x1xf32>
      %c0_13 = arith.constant 0 : index
      %c0_14 = arith.constant 0 : index
      %16 = vector.load %arg3[%c0_13, %c0_14] : memref<8x1xf32, #tpu.memory_space<vmem>>, vector<8x1xf32>
      tpu.vector_store %arg3[%c0_13, %c0_14], %15 {strides = array<i32>} : memref<8x1xf32, #tpu.memory_space<vmem>>, vector<8x1xf32>,
    } else {
    }
    return
  }
  func.func @transform_0(%arg0: i32, %arg1: i32) -> (i32, i32, i32) {
    %c0_i32 = arith.constant 0 : i32
    %c0_i32_0 = arith.constant 0 : i32
    return %arg0, %arg1, %c0_i32 : i32, i32, i32
  }
  func.func @transform_1(%arg0: i32, %arg1: i32) -> (i32, i32) {
    %c0_i32 = arith.constant 0 : i32
    %c0_i32_0 = arith.constant 0 : i32
    return %arg0, %c0_i32 : i32, i32
  }
}

</mosaic_0001>

<llo_original>
// kernel: tpu_custom_call.1
$region0: #{tpu_custom_call.1}
  #allocation0 [shape = 'u32[]', space=smem, size = 0x4, offset = 0x4, fixed_abs, tag = 'smem constant byte address 0x4 - core index']
  #allocation1 [shape = 'u32[72,128]{1,0:T(1,128)}', space=vmem, size = 0x9000, scoped, tag = 'internal scratch']
  #allocation2 [shape = 'f32[8,1]{1,0:T(8,128)}', space=vmem, size = 0x1000, scoped, tag = 'scratch operand']
  %s0 = inlined_call_operand.hbm [shape: f32[8,16,16], index: 0, kind: input, shape index: {}]
  %s1 = inlined_call_operand.vmem [shape: f32[8,1], index: 1, kind: output, shape index: {}]
  %s2 = sld [smem:[#allocation0]]
  $region26: #{tpu_custom_call.1} parent=0
    _
  %s4 = ssub.s32 1, %s2
  %s5 = scalar_select 0, %s4, %s2
  $region1: #{tpu_custom_call.1} parent=0
    #allocation3 [shape = 'u8[65536]{0}', space=vmem, size = 0x10000, scoped, tag = 'input window, operand 0, single buffered']
    #allocation4 [shape = 's32[1]{0}', space=sflag, size = 0x4, scoped, tag = 'scoped memory for tpu_custom_call.1']
    %6 = vsyncpa [#allocation4], 0
    // Predicated region
    $region2: #{tpu_custom_call.1} parent=1 // pred_check
      _
    $region3: #{tpu_custom_call.1} parent=1 // pred_check_branch
      %8 = sbr.rel (0) target = $region5
    $region4: #{tpu_custom_call.1} parent=1 // pred_region
      %10 = vsyncadd [#allocation4], 0
      %s11 = sshll.u32 %s0, 4
      %s12 = int_to_ptr.hbm [resolvable:$true] %s11
      %s13 = sshll.u32 [#allocation3], 4
      %s14 = int_to_ptr.vmem [resolvable:$true] %s13
      %19 = dma.hbm_to_vmem [thread:$0]  %s12, 2048, %s14, [#allocation4], 128, 128, 8
    $region5: #{tpu_custom_call.1} parent=1 // pred_fallthru
      _
    // Predicated region
    $region6: #{tpu_custom_call.1} parent=1 // pred_check
      _
    $region7: #{tpu_custom_call.1} parent=1 // pred_check_branch
      %21 = sbr.rel (0) target = $region9
    $region8: #{tpu_custom_call.1} parent=1 // pred_region
      %23 = dma.done [#allocation4], 2048
    $region9: #{tpu_custom_call.1} parent=1 // pred_fallthru
      _
    %p24 = scmp.eq.s32.totalorder 0, 0
    // Predicated region
    $region10: #{tpu_custom_call.1} parent=1 // pred_check
      %p25 = pneg %p24
    $region11: #{tpu_custom_call.1} parent=1 // pred_check_branch
      %27 = sbr.rel (%p25) target = $region13
    $region12: #{tpu_custom_call.1} parent=1 // pred_region
      %vm28 = vcmask 7168
      %29 = vst.msk [vmem:[#allocation2] sm:$0xff] %vm28, -inf
    $region13: #{tpu_custom_call.1} parent=1 // pred_fallthru
      _
    %v30 = vld [vmem:[#allocation3] sm:$0xff]
    %v31 = vld [vmem:[#allocation3 + $0x8] sm:$0xff]
    %v32 = vld [vmem:[#allocation3 + $0x10] sm:$0xff]
    %v33 = vld [vmem:[#allocation3 + $0x18] sm:$0xff]
    %v34 = vld [vmem:[#allocation3 + $0x20] sm:$0xff]
    %v35 = vld [vmem:[#allocation3 + $0x28] sm:$0xff]
    %v36 = vld [vmem:[#allocation3 + $0x30] sm:$0xff]
    %v37 = vld [vmem:[#allocation3 + $0x38] sm:$0xff]
    %v38 = vld [vmem:[#allocation3 + $0x40] sm:$0xff]
    %v39 = vld [vmem:[#allocation3 + $0x48] sm:$0xff]
    %v40 = vld [vmem:[#allocation3 + $0x50] sm:$0xff]
    %v41 = vld [vmem:[#allocation3 + $0x58] sm:$0xff]
    %v42 = vld [vmem:[#allocation3 + $0x60] sm:$0xff]
    %v43 = vld [vmem:[#allocation3 + $0x68] sm:$0xff]
    %v44 = vld [vmem:[#allocation3 + $0x70] sm:$0xff]
    %v45 = vld [vmem:[#allocation3 + $0x78] sm:$0xff]
    %vm46 = vcmask 130048
    %v47 = vsel %vm46, %v30, 0.0
    %48 = vadd.xlane.f32.xlu0 %v47
    %v49 = vpop.xlane.xlu0 %48
    %v50 = vsel %vm46, %v31, 0.0
    %51 = vadd.xlane.f32.xlu0 %v50
    %v52 = vpop.xlane.xlu0 %51
    %v53 = vsel %vm46, %v32, 0.0
    %54 = vadd.xlane.f32.xlu0 %v53
    %v55 = vpop.xlane.xlu0 %54
    %v56 = vsel %vm46, %v33, 0.0
    %57 = vadd.xlane.f32.xlu0 %v56
    %v58 = vpop.xlane.xlu0 %57
    %v59 = vsel %vm46, %v34, 0.0
    %60 = vadd.xlane.f32.xlu0 %v59
    %v61 = vpop.xlane.xlu0 %60
    %v62 = vsel %vm46, %v35, 0.0
    %63 = vadd.xlane.f32.xlu0 %v62
    %v64 = vpop.xlane.xlu0 %63
    %v65 = vsel %vm46, %v36, 0.0
    %66 = vadd.xlane.f32.xlu0 %v65
    %v67 = vpop.xlane.xlu0 %66
    %v68 = vsel %vm46, %v37, 0.0
    %69 = vadd.xlane.f32.xlu0 %v68
    %v70 = vpop.xlane.xlu0 %69
    %v71 = vsel %vm46, %v38, 0.0
    %72 = vadd.xlane.f32.xlu0 %v71
    %v73 = vpop.xlane.xlu0 %72
    %v74 = vsel %vm46, %v39, 0.0
    %75 = vadd.xlane.f32.xlu0 %v74
    %v76 = vpop.xlane.xlu0 %75
    %v77 = vsel %vm46, %v40, 0.0
    %78 = vadd.xlane.f32.xlu0 %v77
    %v79 = vpop.xlane.xlu0 %78
    %v80 = vsel %vm46, %v41, 0.0
    %81 = vadd.xlane.f32.xlu0 %v80
    %v82 = vpop.xlane.xlu0 %81
    %v83 = vsel %vm46, %v42, 0.0
    %84 = vadd.xlane.f32.xlu0 %v83
    %v85 = vpop.xlane.xlu0 %84
    %v86 = vsel %vm46, %v43, 0.0
    %87 = vadd.xlane.f32.xlu0 %v86
    %v88 = vpop.xlane.xlu0 %87
    %v89 = vsel %vm46, %v44, 0.0
    %90 = vadd.xlane.f32.xlu0 %v89
    %v91 = vpop.xlane.xlu0 %90
    %v92 = vsel %vm46, %v45, 0.0
    %93 = vadd.xlane.f32.xlu0 %v92
    %v94 = vpop.xlane.xlu0 %93
    %v95 = vld [vmem:[#allocation2] sm:$0xff]
    %v112 = vlaneseq
    %v113 = vand.u32 %v112, 127
    %v114 = vperm.slane %v49, %v113
    %v115 = vadd.s32 %v113, 4294967288
    %v116 = vperm.slane %v52, %v115
    %vm117 = vcmask 130112
    %v118 = vsel %vm117, %v116, %v114
    %v119 = vperm.slane %v55, %v113
    %v120 = vperm.slane %v58, %v115
    %v121 = vsel %vm117, %v120, %v119
    %v122 = vperm.slane %v61, %v113
    %v123 = vperm.slane %v64, %v115
    %v124 = vsel %vm117, %v123, %v122
    %v125 = vperm.slane %v67, %v113
    %v126 = vperm.slane %v70, %v115
    %v127 = vsel %vm117, %v126, %v125
    %v128 = vperm.slane %v73, %v113
    %v129 = vperm.slane %v76, %v115
    %v130 = vsel %vm117, %v129, %v128
    %v131 = vperm.slane %v79, %v113
    %v132 = vperm.slane %v82, %v115
    %v133 = vsel %vm117, %v132, %v131
    %v134 = vperm.slane %v85, %v113
    %v135 = vperm.slane %v88, %v115
    %v136 = vsel %vm117, %v135, %v134
    %v137 = vperm.slane %v91, %v113
    %v138 = vperm.slane %v94, %v115
    %v139 = vsel %vm117, %v138, %v137
    %vm140 = vcmask 1041409
    %v141 = vsel %vm140, %v121, %v118
    %vm142 = vcmask 1042434
    %v143 = vsel %vm142, %v124, %v141
    %vm144 = vcmask 1043459
    %v145 = vsel %vm144, %v127, %v143
    %vm146 = vcmask 1044484
    %v147 = vsel %vm146, %v130, %v145
    %vm148 = vcmask 1045509
    %v149 = vsel %vm148, %v133, %v147
    %vm150 = vcmask 1046534
    %v151 = vsel %vm150, %v136, %v149
    %vm152 = vcmask 1047559
    %v153 = vsel %vm152, %v139, %v151
    %v155 = vsel %vm46, %v153, -inf
    %156 = vmax.xlane.f32.xlu0 %v155
    %v157 = vpop.xlane.xlu0 %156
    %v158 = vmax.f32 %v95, %v157
    %vm159 = vcmask 7168
    %160 = vst.msk [vmem:[#allocation2] sm:$0xff] %vm159, %v158
    // Predicated region
    $region14: #{tpu_custom_call.1} parent=1 // pred_check
      %p161 = pneg %p24
    $region15: #{tpu_custom_call.1} parent=1 // pred_check_branch
      %163 = sbr.rel (%p161) target = $region17
    $region16: #{tpu_custom_call.1} parent=1 // pred_region
      %v164 = vld [vmem:[#allocation2] sm:$0xff]
      %v165 = vmul.f32 %v164, 0.0625
      %166 = vst.msk [vmem:[%s1] sm:$0xff] %vm159, %v165
    $region17: #{tpu_custom_call.1} parent=1 // pred_fallthru
      _
    // Predicated region
    $region18: #{tpu_custom_call.1} parent=1 // pred_check
      _
    $region19: #{tpu_custom_call.1} parent=1 // pred_check_branch
      %168 = sbr.rel (0) target = $region21
    $region20: #{tpu_custom_call.1} parent=1 // pred_region
      _
    $region21: #{tpu_custom_call.1} parent=1 // pred_fallthru
      _
    // Predicated region
    $region22: #{tpu_custom_call.1} parent=1 // pred_check
      _
    $region23: #{tpu_custom_call.1} parent=1 // pred_check_branch
      %170 = sbr.rel (0) target = $region25
    $region24: #{tpu_custom_call.1} parent=1 // pred_region
      _
    $region25: #{tpu_custom_call.1} parent=1 // pred_fallthru
      _
    %171 = vsyncpa [#allocation4], 1

</llo_original>
